<compile_context>
chip_gen: v7x
topology: tpu7x:2x2x1
jax: 0.10.0
libtpu: 0.0.40
codegen_flags: <defaults>
</compile_context>

<pallas_src>
import functools

import jax
import jax.numpy as jnp
from jax.experimental import pallas as pl
from jax.experimental.pallas import tpu as pltpu


def _round_up(x, m):
    return -(-x // m) * m


# ----------------------------------------------------------------------------
# Retina (glue, plain JAX): extract multi-scale patches, pool, concat, flatten.
# Semantics copied from retina.foveate / retina.extract_patch.
# ----------------------------------------------------------------------------
def _avg_pool2d(p, k):
    """F.avg_pool2d(p, k) with kernel = stride = k (f32 accumulation)."""
    dt = p.dtype
    B, C, H, W = p.shape
    oh, ow = H // k, W // k
    p = p[:, :, : oh * k, : ow * k].reshape(B, C, oh, k, ow, k)
    return p.astype(jnp.float32).mean(axis=(3, 5)).astype(dt)


def foveate(x, l, patch_size, num_patches, scale, out_dtype=jnp.bfloat16):
    """x: (B, C, H, W) f32, l: (B, 2) in [-1, 1] -> (B, num_patches*C*ps*ps).

    NOTE: the original PyTorch code scales coords[:, 0] by H yet uses it as the
    *width* offset (and vice versa) -- reproduced verbatim; don't "fix" one side.
    NOTE: for odd patch sizes the dynamic_slice start-clamping differs by one
    from the PyTorch padded-index semantics; exact for even sizes (used here).
    """
    B, C, H, W = x.shape
    sizes = [patch_size]
    for _ in range(num_patches - 1):
        sizes.append(int(scale * sizes[-1]))
    max_pad = max(s // 2 for s in sizes)

    # Pad ONCE with the max pad across scales (original re-pads per scale).
    xp = jnp.pad(x.astype(out_dtype),
                 ((0, 0), (0, 0), (max_pad, max_pad), (max_pad, max_pad)))

    img_shape = jnp.array([[H, W]], dtype=jnp.float32)
    coords = (0.5 * ((l + 1.0) * img_shape)).astype(jnp.int32)   # .long() trunc
    from_x, from_y = coords[:, 0], coords[:, 1]

    patches = []
    for s in sizes:
        off = max_pad - s // 2        # shift per-scale slice into max-pad frame

        def slice_one(img, fy, fx, s=s, off=off):
            return jax.lax.dynamic_slice(img, (0, fy + off, fx + off), (C, s, s))

        p = jax.vmap(slice_one)(xp, from_y, from_x)               # (B, C, s, s)
        if s != patch_size:
            p = _avg_pool2d(p, s // patch_size)
        patches.append(p)

    g = jnp.concatenate(patches, axis=1)                          # (B, C*num_patches, ps, ps)
    return g.reshape(B, -1)                                       # PyTorch .view order


# ----------------------------------------------------------------------------
# Pallas kernel: the fused GlimpseNet MLP hot path.
# ----------------------------------------------------------------------------
def glimpse_kernel(g_ref, l_ref, wa_ref, wl_ref, ba_ref, wb_ref, bb_ref, out_ref):
    # layer 1: glimpse path on the MXU (bf16 operands, f32 accumulation)
    z = jnp.dot(g_ref[...], wa_ref[...], preferred_element_type=jnp.float32)
    # l path (only 2 input features): cheap VPU broadcast-mul instead of a K=2 matmul
    l = l_ref[...]                                   # (bt, 2) f32
    wl = wl_ref[...]                                 # (2, h_pad) f32
    z = z + l[:, 0:1] * wl[0:1, :] + l[:, 1:2] * wl[1:2, :] + ba_ref[...]
    h = jnp.maximum(z, 0.0).astype(wb_ref.dtype)     # lane-dense (bt, h_pad) bf16
    # layer 2 (== what + where)
    y = jnp.dot(h, wb_ref[...], preferred_element_type=jnp.float32) + bb_ref[...]
    out_ref[...] = jnp.maximum(y, 0.0).astype(out_ref.dtype)


def pack_params(params, lane=128):
    """Pack the 4 Linears into fused, lane-padded (128-multiple) operands.

    layer-1 columns [0:hg] <- fc1 (glimpse path), [hg:hsum] <- fc2 (l path);
    layer-2 rows    [0:hg] <- fc3,                [hg:hsum] <- fc4.
    Padding is zeros, so padded lanes stay exactly zero through the MLP.
    """
    w1, b1 = params["w1"], params["b1"]   # (d_in, hg), (1, hg)
    w2, b2 = params["w2"], params["b2"]   # (2, hl),   (1, hl)
    w3, b3 = params["w3"], params["b3"]   # (hg, hsum)
    w4, b4 = params["w4"], params["b4"]   # (hl, hsum)
    d_in, hg = w1.shape
    hl = w2.shape[1]
    hsum = hg + hl
    h_pad = _round_up(hsum, lane)         # lane-dense hidden width
    n_pad = _round_up(hsum, lane)         # lane-dense output width

    wa = jnp.zeros((d_in, h_pad), jnp.float32).at[:, :hg].set(w1)
    wl = jnp.zeros((2, h_pad), jnp.float32).at[:, hg:hsum].set(w2)
    ba = (jnp.zeros((1, h_pad), jnp.float32)
          .at[:, :hg].set(b1).at[:, hg:hsum].set(b2))
    wb = (jnp.zeros((h_pad, n_pad), jnp.float32)
          .at[:hg, :hsum].set(w3).at[hg:hsum, :hsum].set(w4))
    bb = jnp.zeros((1, n_pad), jnp.float32).at[:, :hsum].set(b3 + b4)

    return dict(wa=wa.astype(jnp.bfloat16), wl=wl, ba=ba,
                wb=wb.astype(jnp.bfloat16), bb=bb)


@functools.partial(
    jax.jit,
    static_argnames=("hsum", "patch_size", "num_patches", "scale", "batch_tile"))
def glimpse_net_forward(x_t, l_t, packed, *, hsum, patch_size, num_patches,
                        scale, batch_tile=2048):
    # Glimpse extraction stays JAX glue; the fused MLP is the Pallas kernel.
    glimpse = foveate(x_t, l_t, patch_size, num_patches, scale)   # (B, d_in) bf16
    B, d_in = glimpse.shape

    wa, wl, ba = packed["wa"], packed["wl"], packed["ba"]
    wb, bb = packed["wb"], packed["bb"]
    h_pad = wa.shape[1]          # padded hidden width  (multiple of 128)
    n_pad = wb.shape[1]          # padded output width  (multiple of 128)

    # Batch tiling: one block when small; otherwise large tiles (multiple of 16
    # for bf16 sublane packing) with an even grid length for v7x megacore.
    if B <= batch_tile:
        bt = _round_up(B, 16)
    else:
        num_tiles = _round_up(pl.cdiv(B, batch_tile), 2)
        bt = _round_up(pl.cdiv(B, num_tiles), 16)
    Bp = _round_up(B, bt)

    l_in = l_t.astype(jnp.float32)
    if Bp != B:
        glimpse = jnp.pad(glimpse, ((0, Bp - B), (0, 0)))
        l_in = jnp.pad(l_in, ((0, Bp - B), (0, 0)))

    flops = 2 * Bp * (d_in * h_pad + h_pad * n_pad) + 6 * Bp * h_pad
    bytes_accessed = (Bp * d_in * 2 + Bp * 2 * 4 + Bp * n_pad * 2
                      + wa.size * 2 + wl.size * 4 + ba.size * 4
                      + wb.size * 2 + bb.size * 4)

    out = pl.pallas_call(
        glimpse_kernel,
        out_shape=jax.ShapeDtypeStruct((Bp, n_pad), jnp.bfloat16),
        grid_spec=pltpu.PrefetchScalarGridSpec(
            num_scalar_prefetch=0,
            grid=(Bp // bt,),
            in_specs=[
                pl.BlockSpec((bt, d_in), lambda i: (i, 0)),     # glimpse (batch-tiled)
                pl.BlockSpec((bt, 2), lambda i: (i, 0)),        # l_t (batch-tiled)
                pl.BlockSpec((d_in, h_pad), lambda i: (0, 0)),  # VMEM-resident weights
                pl.BlockSpec((2, h_pad), lambda i: (0, 0)),
                pl.BlockSpec((1, h_pad), lambda i: (0, 0)),
                pl.BlockSpec((h_pad, n_pad), lambda i: (0, 0)),
                pl.BlockSpec((1, n_pad), lambda i: (0, 0)),
            ],
            out_specs=pl.BlockSpec((bt, n_pad), lambda i: (i, 0)),
        ),
        compiler_params=pltpu.CompilerParams(
            dimension_semantics=("parallel",)),                  # megacore on v7x
        cost_estimate=pl.CostEstimate(
            flops=flops, transcendentals=0, bytes_accessed=bytes_accessed),
    )(glimpse, l_in, wa, wl, ba, wb, bb)

    # Contract of the module: (B, hidden_g + hidden_l).  Output is bf16 now.
    return out[:B, :hsum]


# ----------------------------------------------------------------------------
# Deterministic parameter init (PyTorch Linear-style uniform(-1/sqrt(in), ...)).
# ----------------------------------------------------------------------------
def init_params(key, d_in, hidden_g, hidden_l):
    def linear(key, fan_in, fan_out):
        kw, kb = jax.random.split(key)
        bound = 1.0 / jnp.sqrt(fan_in)
        w = jax.random.uniform(kw, (fan_in, fan_out), jnp.float32, -bound, bound)
        b = jax.random.uniform(kb, (1, fan_out), jnp.float32, -bound, bound)
        return w, b

    k1, k2, k3, k4 = jax.random.split(key, 4)
    w1, b1 = linear(k1, d_in, hidden_g)                 # fc1: D_in -> hidden_g
    w2, b2 = linear(k2, 2, hidden_l)                    # fc2: 2 -> hidden_l
    w3, b3 = linear(k3, hidden_g, hidden_g + hidden_l)  # fc3
    w4, b4 = linear(k4, hidden_l, hidden_g + hidden_l)  # fc4
    return dict(w1=w1, b1=b1, w2=w2, b2=b2, w3=w3, b3=b3, w4=w4, b4=b4)


# ----------------------------------------------------------------------------
# Pure-JAX reference with the same numerical contract (bf16 matmul operands,
# f32 accumulation, f32 l-path, unfused layers).
# ----------------------------------------------------------------------------
def reference_forward(x_t, l_t, params, *, patch_size, num_patches, scale):
    glimpse = foveate(x_t, l_t, patch_size, num_patches, scale)   # bf16
    bf = jnp.bfloat16
    h1 = jnp.maximum(
        jnp.dot(glimpse, params["w1"].astype(bf),
                preferred_element_type=jnp.float32) + params["b1"], 0.0)
    h2 = jnp.maximum(jnp.dot(l_t, params["w2"]) + params["b2"], 0.0)   # f32 path
    what = jnp.dot(h1.astype(bf), params["w3"].astype(bf),
                   preferred_element_type=jnp.float32) + params["b3"]
    where = jnp.dot(h2.astype(bf), params["w4"].astype(bf),
                    preferred_element_type=jnp.float32) + params["b4"]
    return jnp.maximum(what + where, 0.0)


if __name__ == "__main__":
    # Small config consistent with the module (conv=False path).
    B, C, H, W = 2, 4, 16, 16
    patch_size, num_patches, scale = 4, 2, 2
    hidden_g, hidden_l = 32, 16
    d_in = num_patches * patch_size * patch_size * C   # = 128 (lane-dense glimpse)

    key = jax.random.PRNGKey(0)
    kx, kl, kp = jax.random.split(key, 3)
    x_t = jax.random.normal(kx, (B, C, H, W), jnp.float32)            # NCHW
    l_t = jax.random.uniform(kl, (B, 2), jnp.float32, -1.0, 1.0)      # locations in [-1, 1]
    params = init_params(kp, d_in, hidden_g, hidden_l)
    packed = pack_params(params)

    out = glimpse_net_forward(x_t, l_t, packed,
                              hsum=hidden_g + hidden_l,
                              patch_size=patch_size,
                              num_patches=num_patches,
                              scale=scale)
    out = jax.block_until_ready(out)

    ref = reference_forward(x_t, l_t, params,
                            patch_size=patch_size,
                            num_patches=num_patches,
                            scale=scale)
    assert out.shape == (B, hidden_g + hidden_l), out.shape
    err = float(jnp.max(jnp.abs(out.astype(jnp.float32) - ref)))
    assert err < 2e-2, err   # bf16 output quantization + accumulation-order noise

    print("KERNEL_OK")
</pallas_src>

<mosaic_0001>
module attributes {stable_mosaic.version = 11 : i64} {
  func.func @glimpse_kernel(%arg0: i32, %arg1: memref<16x128xbf16, #tpu.memory_space<vmem>>, %arg2: memref<16x2xf32, #tpu.memory_space<vmem>>, %arg3: memref<128x128xbf16, #tpu.memory_space<vmem>>, %arg4: memref<2x128xf32, #tpu.memory_space<vmem>>, %arg5: memref<1x128xf32, #tpu.memory_space<vmem>>, %arg6: memref<128x128xbf16, #tpu.memory_space<vmem>>, %arg7: memref<1x128xf32, #tpu.memory_space<vmem>>, %arg8: memref<16x128xbf16, #tpu.memory_space<vmem>>) attributes {dimension_semantics = [#tpu.dimension_semantics<parallel>], iteration_bounds = array<i64: 1>, scalar_prefetch = 0 : i64, scratch_operands = 0 : i64, tpu.core_type = #tpu.core_type<tc>, window_params = [{transform_indices = @transform_0, window_bounds = array<i64: 16, 128>}, {transform_indices = @transform_1, window_bounds = array<i64: 16, 2>}, {pipeline_mode = #tpu.pipeline_mode<synchronous>, transform_indices = @transform_2, window_bounds = array<i64: 128, 128>}, {pipeline_mode = #tpu.pipeline_mode<synchronous>, transform_indices = @transform_3, window_bounds = array<i64: 2, 128>}, {pipeline_mode = #tpu.pipeline_mode<synchronous>, transform_indices = @transform_4, window_bounds = array<i64: 1, 128>}, {pipeline_mode = #tpu.pipeline_mode<synchronous>, transform_indices = @transform_5, window_bounds = array<i64: 128, 128>}, {pipeline_mode = #tpu.pipeline_mode<synchronous>, transform_indices = @transform_6, window_bounds = array<i64: 1, 128>}, {transform_indices = @transform_7, window_bounds = array<i64: 16, 128>}]} {
    %c0 = arith.constant 0 : index
    %c0_0 = arith.constant 0 : index
    %0 = vector.load %arg1[%c0, %c0_0] : memref<16x128xbf16, #tpu.memory_space<vmem>>, vector<16x128xbf16>
    %c0_1 = arith.constant 0 : index
    %c0_2 = arith.constant 0 : index
    %1 = vector.load %arg3[%c0_1, %c0_2] : memref<128x128xbf16, #tpu.memory_space<vmem>>, vector<128x128xbf16>
    %cst = arith.constant dense<0.000000e+00> : vector<16x128xf32>
    %2 = tpu.matmul %0, %1, %cst {dimension_numbers = #tpu.dot_dimension_numbers<[1], [0], [0], [1], [0, 0, 1, 1], [], []>} : vector<16x128xbf16>, vector<128x128xbf16>, vector<16x128xf32> -> vector<16x128xf32>
    %c0_3 = arith.constant 0 : index
    %c0_4 = arith.constant 0 : index
    %3 = vector.load %arg2[%c0_3, %c0_4] : memref<16x2xf32, #tpu.memory_space<vmem>>, vector<16x2xf32>
    %c0_5 = arith.constant 0 : index
    %c0_6 = arith.constant 0 : index
    %4 = vector.load %arg4[%c0_5, %c0_6] : memref<2x128xf32, #tpu.memory_space<vmem>>, vector<2x128xf32>
    %5 = vector.extract_strided_slice %3 {offsets = [0, 0], sizes = [16, 1], strides = [1, 1]} : vector<16x2xf32> to vector<16x1xf32>
    %6 = vector.extract_strided_slice %4 {offsets = [0, 0], sizes = [1, 128], strides = [1, 1]} : vector<2x128xf32> to vector<1x128xf32>
    %7 = vector.broadcast %5 : vector<16x1xf32> to vector<16x128xf32>
    %8 = vector.broadcast %6 : vector<1x128xf32> to vector<16x128xf32>
    %9 = arith.mulf %7, %8 : vector<16x128xf32>
    %10 = arith.addf %2, %9 : vector<16x128xf32>
    %11 = vector.extract_strided_slice %3 {offsets = [0, 1], sizes = [16, 1], strides = [1, 1]} : vector<16x2xf32> to vector<16x1xf32>
    %12 = vector.extract_strided_slice %4 {offsets = [1, 0], sizes = [1, 128], strides = [1, 1]} : vector<2x128xf32> to vector<1x128xf32>
    %13 = vector.broadcast %11 : vector<16x1xf32> to vector<16x128xf32>
    %14 = vector.broadcast %12 : vector<1x128xf32> to vector<16x128xf32>
    %15 = arith.mulf %13, %14 : vector<16x128xf32>
    %16 = arith.addf %10, %15 : vector<16x128xf32>
    %c0_7 = arith.constant 0 : index
    %c0_8 = arith.constant 0 : index
    %17 = vector.load %arg5[%c0_7, %c0_8] : memref<1x128xf32, #tpu.memory_space<vmem>>, vector<1x128xf32>
    %18 = vector.broadcast %17 : vector<1x128xf32> to vector<16x128xf32>
    %19 = arith.addf %16, %18 : vector<16x128xf32>
    %cst_9 = arith.constant 0.000000e+00 : f32
    %20 = vector.broadcast %cst_9 : f32 to vector<16x128xf32>
    %21 = arith.maximumf %19, %20 : vector<16x128xf32>
    %22 = arith.truncf %21 : vector<16x128xf32> to vector<16x128xbf16>
    %c0_10 = arith.constant 0 : index
    %c0_11 = arith.constant 0 : index
    %23 = vector.load %arg6[%c0_10, %c0_11] : memref<128x128xbf16, #tpu.memory_space<vmem>>, vector<128x128xbf16>
    %cst_12 = arith.constant dense<0.000000e+00> : vector<16x128xf32>
    %24 = tpu.matmul %22, %23, %cst_12 {dimension_numbers = #tpu.dot_dimension_numbers<[1], [0], [0], [1], [0, 0, 1, 1], [], []>} : vector<16x128xbf16>, vector<128x128xbf16>, vector<16x128xf32> -> vector<16x128xf32>
    %c0_13 = arith.constant 0 : index
    %c0_14 = arith.constant 0 : index
    %25 = vector.load %arg7[%c0_13, %c0_14] : memref<1x128xf32, #tpu.memory_space<vmem>>, vector<1x128xf32>
    %26 = vector.broadcast %25 : vector<1x128xf32> to vector<16x128xf32>
    %27 = arith.addf %24, %26 : vector<16x128xf32>
    %cst_15 = arith.constant 0.000000e+00 : f32
    %28 = vector.broadcast %cst_15 : f32 to vector<16x128xf32>
    %29 = arith.maximumf %27, %28 : vector<16x128xf32>
    %30 = arith.truncf %29 : vector<16x128xf32> to vector<16x128xbf16>
    %c0_16 = arith.constant 0 : index
    %c0_17 = arith.constant 0 : index
    %31 = vector.load %arg8[%c0_16, %c0_17] : memref<16x128xbf16, #tpu.memory_space<vmem>>, vector<16x128xbf16>
    tpu.vector_store %arg8[%c0_16, %c0_17], %30 {strides = array<i32>} : memref<16x128xbf16, #tpu.memory_space<vmem>>, vector<16x128xbf16>,
    return
  }
  func.func @transform_0(%arg0: i32) -> (i32, i32) {
    %c0_i32 = arith.constant 0 : i32
    %c0_i32_0 = arith.constant 0 : i32
    return %arg0, %c0_i32 : i32, i32
  }
  func.func @transform_1(%arg0: i32) -> (i32, i32) {
    %c0_i32 = arith.constant 0 : i32
    %c0_i32_0 = arith.constant 0 : i32
    return %arg0, %c0_i32 : i32, i32
  }
  func.func @transform_2(%arg0: i32) -> (i32, i32) {
    %c0_i32 = arith.constant 0 : i32
    %c0_i32_0 = arith.constant 0 : i32
    %c0_i32_1 = arith.constant 0 : i32
    return %c0_i32, %c0_i32_0 : i32, i32
  }
  func.func @transform_3(%arg0: i32) -> (i32, i32) {
    %c0_i32 = arith.constant 0 : i32
    %c0_i32_0 = arith.constant 0 : i32
    %c0_i32_1 = arith.constant 0 : i32
    return %c0_i32, %c0_i32_0 : i32, i32
  }
  func.func @transform_4(%arg0: i32) -> (i32, i32) {
    %c0_i32 = arith.constant 0 : i32
    %c0_i32_0 = arith.constant 0 : i32
    %c0_i32_1 = arith.constant 0 : i32
    return %c0_i32, %c0_i32_0 : i32, i32
  }
  func.func @transform_5(%arg0: i32) -> (i32, i32) {
    %c0_i32 = arith.constant 0 : i32
    %c0_i32_0 = arith.constant 0 : i32
    %c0_i32_1 = arith.constant 0 : i32
    return %c0_i32, %c0_i32_0 : i32, i32
  }
  func.func @transform_6(%arg0: i32) -> (i32, i32) {
    %c0_i32 = arith.constant 0 : i32
    %c0_i32_0 = arith.constant 0 : i32
    %c0_i32_1 = arith.constant 0 : i32
    return %c0_i32, %c0_i32_0 : i32, i32
  }
  func.func @transform_7(%arg0: i32) -> (i32, i32) {
    %c0_i32 = arith.constant 0 : i32
    %c0_i32_0 = arith.constant 0 : i32
    return %arg0, %c0_i32 : i32, i32
  }
}

</mosaic_0001>

<llo_original>
// kernel: glimpse_net_forward.1
$region0: #{glimpse_net_forward.1}
  #allocation0 [shape = 'u32[]', space=smem, size = 0x4, offset = 0x4, fixed_abs, tag = 'smem constant byte address 0x4 - core index']
  #allocation1 [shape = 'u32[144,128]{1,0:T(1,128)}', space=vmem, size = 0x12000, scoped, tag = 'internal scratch']
  %s0 = inlined_call_operand.vmem [shape: bf16[16,128], index: 0, kind: input, shape index: {}]
  %s1 = inlined_call_operand.vmem [shape: f32[16,2], index: 1, kind: input, shape index: {}]
  %s2 = inlined_call_operand.vmem [shape: bf16[128,128], index: 2, kind: input, shape index: {}]
  %s3 = inlined_call_operand.vmem [shape: f32[2,128], index: 3, kind: input, shape index: {}]
  %s4 = inlined_call_operand.vmem [shape: f32[1,128], index: 4, kind: input, shape index: {}]
  %s5 = inlined_call_operand.vmem [shape: bf16[128,128], index: 5, kind: input, shape index: {}]
  %s6 = inlined_call_operand.vmem [shape: f32[1,128], index: 6, kind: input, shape index: {}]
  %s7 = inlined_call_operand.vmem [shape: bf16[16,128], index: 7, kind: output, shape index: {}]
  %s8 = sld [smem:[#allocation0]]
  $region38: #{glimpse_net_forward.1} parent=0
    _
  %s10 = ssub.s32 1, %s8
  %s11 = scalar_select 0, %s10, %s8
  // Predicated region
  $region2: #{glimpse_net_forward.1} parent=0 // pred_check
    _
  $region3: #{glimpse_net_forward.1} parent=0 // pred_check_branch
    %13 = sbr.rel (0) target = $region5
  $region4: #{glimpse_net_forward.1} parent=0 // pred_region
    _
  $region5: #{glimpse_net_forward.1} parent=0 // pred_fallthru
    _
  // Predicated region
  $region6: #{glimpse_net_forward.1} parent=0 // pred_check
    _
  $region7: #{glimpse_net_forward.1} parent=0 // pred_check_branch
    %15 = sbr.rel (0) target = $region9
  $region8: #{glimpse_net_forward.1} parent=0 // pred_region
    _
  $region9: #{glimpse_net_forward.1} parent=0 // pred_fallthru
    _
  // Predicated region
  $region10: #{glimpse_net_forward.1} parent=0 // pred_check
    _
  $region11: #{glimpse_net_forward.1} parent=0 // pred_check_branch
    %17 = sbr.rel (0) target = $region13
  $region12: #{glimpse_net_forward.1} parent=0 // pred_region
    _
  $region13: #{glimpse_net_forward.1} parent=0 // pred_fallthru
    _
  // Predicated region
  $region14: #{glimpse_net_forward.1} parent=0 // pred_check
    _
  $region15: #{glimpse_net_forward.1} parent=0 // pred_check_branch
    %19 = sbr.rel (0) target = $region17
  $region16: #{glimpse_net_forward.1} parent=0 // pred_region
    _
  $region17: #{glimpse_net_forward.1} parent=0 // pred_fallthru
    _
  // Predicated region
  $region18: #{glimpse_net_forward.1} parent=0 // pred_check
    _
  $region19: #{glimpse_net_forward.1} parent=0 // pred_check_branch
    %21 = sbr.rel (0) target = $region21
  $region20: #{glimpse_net_forward.1} parent=0 // pred_region
    _
  $region21: #{glimpse_net_forward.1} parent=0 // pred_fallthru
    _
  // Predicated region
  $region22: #{glimpse_net_forward.1} parent=0 // pred_check
    _
  $region23: #{glimpse_net_forward.1} parent=0 // pred_check_branch
    %23 = sbr.rel (0) target = $region25
  $region24: #{glimpse_net_forward.1} parent=0 // pred_region
    _
  $region25: #{glimpse_net_forward.1} parent=0 // pred_fallthru
    _
  // Predicated region
  $region26: #{glimpse_net_forward.1} parent=0 // pred_check
    _
  $region27: #{glimpse_net_forward.1} parent=0 // pred_check_branch
    %25 = sbr.rel (0) target = $region29
  $region28: #{glimpse_net_forward.1} parent=0 // pred_region
    _
  $region29: #{glimpse_net_forward.1} parent=0 // pred_fallthru
    _
  %v27 = vld [vmem:[%s0] sm:$0xf]
  %v28 = vld [vmem:[%s0 + $0x4] sm:$0xf]
  %v29 = vld [vmem:[%s2] sm:$0xf]
  %v30 = vld [vmem:[%s2 + $0x4] sm:$0xf]
  %v31 = vld [vmem:[%s2 + $0x8] sm:$0xf]
  %v32 = vld [vmem:[%s2 + $0xc] sm:$0xf]
  %v33 = vld [vmem:[%s2 + $0x10] sm:$0xf]
  %v34 = vld [vmem:[%s2 + $0x14] sm:$0xf]
  %v35 = vld [vmem:[%s2 + $0x18] sm:$0xf]
  %v36 = vld [vmem:[%s2 + $0x1c] sm:$0xf]
  %v37 = vld [vmem:[%s2 + $0x20] sm:$0xf]
  %v38 = vld [vmem:[%s2 + $0x24] sm:$0xf]
  %v39 = vld [vmem:[%s2 + $0x28] sm:$0xf]
  %v40 = vld [vmem:[%s2 + $0x2c] sm:$0xf]
  %v41 = vld [vmem:[%s2 + $0x30] sm:$0xf]
  %v42 = vld [vmem:[%s2 + $0x34] sm:$0xf]
  %v43 = vld [vmem:[%s2 + $0x38] sm:$0xf]
  %v44 = vld [vmem:[%s2 + $0x3c] sm:$0xf]
  %v45 = vld [vmem:[%s1] sm:$0xff]
  %v46 = vld [vmem:[%s1 + $0x8] sm:$0xff]
  %v47 = vld [vmem:[%s3] sm:$0x3]
  %49 = vset.pattern.permute.xlu0 0
  %50 = vperm.xlu0 %49, %v45
  %v51 = vpop.permute.xlu0 %50
  %54 = vset.pattern.permute.xlu0 0
  %55 = vperm.xlu0 %54, %v46
  %v56 = vpop.permute.xlu0 %55
  %v58 = vlaneseq
  %v59 = vshrl.u32 %v58, 7
  %v60 = vsub.s32 0, %v59
  %v61 = vrot.slane %v47, %v60
  %v62 = vmul.f32 %v51, %v61
  %v63 = vmul.f32 %v56, %v61
  %v66 = vunpack.c.l.b16 %v27
  %v67 = vunpack.c.l.b16 %v28
  %v68 = vpack.c.b16 %v67, %v66
  %v86 = vunpack.c.l.b16 %v29
  %v87 = vunpack.c.l.b16 %v30
  %v88 = vunpack.c.l.b16 %v31
  %v89 = vunpack.c.l.b16 %v32
  %v90 = vunpack.c.l.b16 %v33
  %v91 = vunpack.c.l.b16 %v34
  %v92 = vunpack.c.l.b16 %v35
  %v93 = vunpack.c.l.b16 %v36
  %v94 = vunpack.c.l.b16 %v37
  %v95 = vunpack.c.l.b16 %v38
  %v96 = vunpack.c.l.b16 %v39
  %v97 = vunpack.c.l.b16 %v40
  %v98 = vunpack.c.l.b16 %v41
  %v99 = vunpack.c.l.b16 %v42
  %v100 = vunpack.c.l.b16 %v43
  %v101 = vunpack.c.l.b16 %v44
  %v102 = vpack.c.b16 %v87, %v86
  %v103 = vpack.c.b16 %v89, %v88
  %v104 = vpack.c.b16 %v91, %v90
  %v105 = vpack.c.b16 %v93, %v92
  %v106 = vpack.c.b16 %v95, %v94
  %v107 = vpack.c.b16 %v97, %v96
  %v108 = vpack.c.b16 %v99, %v98
  %v109 = vpack.c.b16 %v101, %v100
  %118 = vmatprep.subr.bf16.mxu0 0
  %119 = vmatpush1.bf16.msra.mxu0 %v102
  %120 = vmatprep.subr.bf16.mxu0 0
  %121 = vmatpush1.bf16.msra.mxu0 %v103
  %122 = vmatprep.subr.bf16.mxu0 0
  %123 = vmatpush1.bf16.msra.mxu0 %v104
  %124 = vmatprep.subr.bf16.mxu0 0
  %125 = vmatpush1.bf16.msra.mxu0 %v105
  %126 = vmatprep.subr.bf16.mxu0 0
  %127 = vmatpush1.bf16.msra.mxu0 %v106
  %128 = vmatprep.subr.bf16.mxu0 0
  %129 = vmatpush1.bf16.msra.mxu0 %v107
  %130 = vmatprep.subr.bf16.mxu0 0
  %131 = vmatpush1.bf16.msra.mxu0 %v108
  %132 = vmatprep.subr.bf16.mxu0 0
  %133 = vmatpush1.bf16.msra.mxu0 %v109
  %134 = vmatprep.subr.bf16.mxu0 0
  %135 = vmatpush1.bf16.msra.mxu0 0
  %136 = vmatprep.subr.bf16.mxu0 0
  %137 = vmatpush1.bf16.msra.mxu0 0
  %138 = vmatprep.subr.bf16.mxu0 0
  %139 = vmatpush1.bf16.msra.mxu0 0
  %140 = vmatprep.subr.bf16.mxu0 0
  %141 = vmatpush1.bf16.msra.mxu0 0
  %142 = vmatprep.subr.bf16.mxu0 0
  %143 = vmatpush1.bf16.msra.mxu0 0
  %144 = vmatprep.subr.bf16.mxu0 0
  %145 = vmatpush1.bf16.msra.mxu0 0
  %146 = vmatprep.subr.bf16.mxu0 0
  %147 = vmatpush1.bf16.msra.mxu0 0
  %148 = vmatprep.subr.bf16.mxu0 0
  %149 = vmatpush1.bf16.msra.mxu0 0
  %150 = vmatprep.mubr.bf16.mxu0 0
  %151 = vmatmul.mubr.bf16.gmra.mrb[0].mxu0 %v68
  %v152 = vpop.f32.mrb[0].mxu0
  %v153 = vadd.f32 %v62, %v152
  %v154 = vpop.f32.mrb[0].mxu0
  %v155 = vpop.f32.mrb[0].mxu0
  %v156 = vadd.f32 %v63, %v155
  %v157 = vpop.f32.mrb[0].mxu0
  %158 = vdwg.mxu0
  %159 = vset.pattern.permute.xlu0 1
  %160 = vperm.xlu0 %159, %v45
  %v161 = vpop.permute.xlu0 %160
  %163 = vset.pattern.permute.xlu0 1
  %164 = vperm.xlu0 %163, %v46
  %v165 = vpop.permute.xlu0 %164
  %v167 = vlaneseq
  %v168 = vshrl.u32 %v167, 7
  %v169 = vsub.s32 1, %v168
  %v170 = vrot.slane %v47, %v169
  %v171 = vmul.f32 %v161, %v170
  %v172 = vmul.f32 %v165, %v170
  %v173 = vadd.f32 %v153, %v171
  %v174 = vadd.f32 %v156, %v172
  %v175 = vld [vmem:[%s4] sm:$0x1]
  %v177 = vlaneseq
  %v178 = vshrl.u32 %v177, 7
  %v179 = vsub.s32 0, %v178
  %v180 = vrot.slane %v175, %v179
  %v182 = vadd.f32 %v173, %v180
  %v183 = vadd.f32 %v174, %v180
  %v184 = vmax.f32 %v182, 0.0
  %v185 = vmax.f32 %v183, 0.0
  %v186 = vpack.c.bf16 %v185, %v184
  %v187 = vld [vmem:[%s5] sm:$0xf]
  %v188 = vld [vmem:[%s5 + $0x4] sm:$0xf]
  %v189 = vld [vmem:[%s5 + $0x8] sm:$0xf]
  %v190 = vld [vmem:[%s5 + $0xc] sm:$0xf]
  %v191 = vld [vmem:[%s5 + $0x10] sm:$0xf]
  %v192 = vld [vmem:[%s5 + $0x14] sm:$0xf]
  %v193 = vld [vmem:[%s5 + $0x18] sm:$0xf]
  %v194 = vld [vmem:[%s5 + $0x1c] sm:$0xf]
  %v195 = vld [vmem:[%s5 + $0x20] sm:$0xf]
  %v196 = vld [vmem:[%s5 + $0x24] sm:$0xf]
  %v197 = vld [vmem:[%s5 + $0x28] sm:$0xf]
  %v198 = vld [vmem:[%s5 + $0x2c] sm:$0xf]
  %v199 = vld [vmem:[%s5 + $0x30] sm:$0xf]
  %v200 = vld [vmem:[%s5 + $0x34] sm:$0xf]
  %v201 = vld [vmem:[%s5 + $0x38] sm:$0xf]
  %v202 = vld [vmem:[%s5 + $0x3c] sm:$0xf]
  %v203 = vld [vmem:[%s6] sm:$0x1]
  %v205 = vlaneseq
  %v206 = vshrl.u32 %v205, 7
  %v207 = vsub.s32 0, %v206
  %v208 = vrot.slane %v203, %v207
  %v226 = vunpack.c.l.b16 %v187
  %v227 = vunpack.c.l.b16 %v188
  %v228 = vunpack.c.l.b16 %v189
  %v229 = vunpack.c.l.b16 %v190
  %v230 = vunpack.c.l.b16 %v191
  %v231 = vunpack.c.l.b16 %v192
  %v232 = vunpack.c.l.b16 %v193
  %v233 = vunpack.c.l.b16 %v194
  %v234 = vunpack.c.l.b16 %v195
  %v235 = vunpack.c.l.b16 %v196
  %v236 = vunpack.c.l.b16 %v197
  %v237 = vunpack.c.l.b16 %v198
  %v238 = vunpack.c.l.b16 %v199
  %v239 = vunpack.c.l.b16 %v200
  %v240 = vunpack.c.l.b16 %v201
  %v241 = vunpack.c.l.b16 %v202
  %v242 = vpack.c.b16 %v227, %v226
  %v243 = vpack.c.b16 %v229, %v228
  %v244 = vpack.c.b16 %v231, %v230
  %v245 = vpack.c.b16 %v233, %v232
  %v246 = vpack.c.b16 %v235, %v234
  %v247 = vpack.c.b16 %v237, %v236
  %v248 = vpack.c.b16 %v239, %v238
  %v249 = vpack.c.b16 %v241, %v240
  %258 = vmatprep.subr.bf16.mxu0 0
  %259 = vmatpush1.bf16.msra.mxu0 %v242
  %260 = vmatprep.subr.bf16.mxu0 0
  %261 = vmatpush1.bf16.msra.mxu0 %v243
  %262 = vmatprep.subr.bf16.mxu0 0
  %263 = vmatpush1.bf16.msra.mxu0 %v244
  %264 = vmatprep.subr.bf16.mxu0 0
  %265 = vmatpush1.bf16.msra.mxu0 %v245
  %266 = vmatprep.subr.bf16.mxu0 0
  %267 = vmatpush1.bf16.msra.mxu0 %v246
  %268 = vmatprep.subr.bf16.mxu0 0
  %269 = vmatpush1.bf16.msra.mxu0 %v247
  %270 = vmatprep.subr.bf16.mxu0 0
  %271 = vmatpush1.bf16.msra.mxu0 %v248
  %272 = vmatprep.subr.bf16.mxu0 0
  %273 = vmatpush1.bf16.msra.mxu0 %v249
  %274 = vmatprep.subr.bf16.mxu0 0
  %275 = vmatpush1.bf16.msra.mxu0 0
  %276 = vmatprep.subr.bf16.mxu0 0
  %277 = vmatpush1.bf16.msra.mxu0 0
  %278 = vmatprep.subr.bf16.mxu0 0
  %279 = vmatpush1.bf16.msra.mxu0 0
  %280 = vmatprep.subr.bf16.mxu0 0
  %281 = vmatpush1.bf16.msra.mxu0 0
  %282 = vmatprep.subr.bf16.mxu0 0
  %283 = vmatpush1.bf16.msra.mxu0 0
  %284 = vmatprep.subr.bf16.mxu0 0
  %285 = vmatpush1.bf16.msra.mxu0 0
  %286 = vmatprep.subr.bf16.mxu0 0
  %287 = vmatpush1.bf16.msra.mxu0 0
  %288 = vmatprep.subr.bf16.mxu0 0
  %289 = vmatpush1.bf16.msra.mxu0 0
  %290 = vmatprep.mubr.bf16.mxu0 0
  %291 = vmatmul.mubr.bf16.gmra.mrb[0].mxu0 %v186
  %v292 = vpop.f32.mrb[0].mxu0
  %v293 = vadd.f32 %v208, %v292
  %v294 = vpop.f32.mrb[0].mxu0
  %v295 = vpop.f32.mrb[0].mxu0
  %v296 = vadd.f32 %v208, %v295
  %v297 = vpop.f32.mrb[0].mxu0
  %298 = vdwg.mxu0
  %v299 = vmax.f32 %v293, 0.0
  %v300 = vmax.f32 %v296, 0.0
  %v301 = vpack.c.bf16 %v300, %v299
  %v303 = vunpack.c.l.b16 %v301
  %v304 = vunpack.c.h.b16 %v301
  %v305 = vpack.c.b16 %v303, %v303
  %v306 = vpack.c.b16 %v304, %v304
  %309 = vst [vmem:[%s7] sm:$0xf] %v305
  %310 = vst [vmem:[%s7 + $0x4] sm:$0xf] %v306
  // Predicated region
  $region30: #{glimpse_net_forward.1} parent=0 // pred_check
    _
  $region31: #{glimpse_net_forward.1} parent=0 // pred_check_branch
    %312 = sbr.rel (0) target = $region33
  $region32: #{glimpse_net_forward.1} parent=0 // pred_region
    _
  $region33: #{glimpse_net_forward.1} parent=0 // pred_fallthru
    _
  // Predicated region
  $region34: #{glimpse_net_forward.1} parent=0 // pred_check
    _
  $region35: #{glimpse_net_forward.1} parent=0 // pred_check_branch
    %314 = sbr.rel (0) target = $region37
  $region36: #{glimpse_net_forward.1} parent=0 // pred_region
    _
  $region37: #{glimpse_net_forward.1} parent=0 // pred_fallthru
    _

</llo_original>
